<compile_context>
chip_gen: v5e
topology: v5e:2x2
jax: 0.10.0
libtpu: 0.0.40
codegen_flags: <defaults>
</compile_context>

<pallas_src>
import math
import functools

import jax
import jax.numpy as jnp
from jax import lax
from jax.experimental import pallas as pl
from jax.experimental.pallas import tpu as pltpu


# ----------------------------------------------------------------------------
# Parameter (buffer) construction -- mirrors PositionalEncoding.__init__
# ----------------------------------------------------------------------------
def build_pe_table(max_len: int, d_model: int, dtype=jnp.float32) -> jnp.ndarray:
    """Returns pe of shape (max_len, d_model)."""
    position = jnp.arange(0, max_len, dtype=jnp.float32)[:, None]          # (L, 1)
    div_term = jnp.exp(
        jnp.arange(0, d_model, 2, dtype=jnp.float32) * (-math.log(10000.0) / d_model)
    )                                                                       # (D/2,)
    pe = jnp.zeros((max_len, d_model), dtype=jnp.float32)
    pe = pe.at[:, 0::2].set(jnp.sin(position * div_term))
    pe = pe.at[:, 1::2].set(jnp.cos(position * div_term))
    return pe.astype(dtype)


# ----------------------------------------------------------------------------
# Pallas kernels
# ----------------------------------------------------------------------------
def _pe_add_kernel(x_ref, pe_ref, o_ref):
    # x_ref: (TS, B, D), pe_ref: (TS, 1, D) -> broadcast add over batch.
    o_ref[...] = (x_ref[...] + pe_ref[...]).astype(o_ref.dtype)


def _pe_add_dropout_kernel(x_ref, pe_ref, o_ref, *, rate: float, seed: int):
    # Training-mode forward: (x + pe) then inverted dropout with keep prob 1-rate.
    ts, b, d = x_ref.shape
    y = (x_ref[...] + pe_ref[...]).astype(jnp.float32)

    # Global element index (decorrelated across grid tiles, grid-invariant).
    s0 = pl.program_id(0) * ts
    i_idx = lax.broadcasted_iota(jnp.int32, (ts, b, d), 0)
    b_idx = lax.broadcasted_iota(jnp.int32, (ts, b, d), 1)
    d_idx = lax.broadcasted_iota(jnp.int32, (ts, b, d), 2)
    gidx = ((s0 + i_idx) * b + b_idx) * d + d_idx

    # Counter-based hash (fmix32-style) on the VPU: only int mul/xor/shift.
    h = gidx.astype(jnp.uint32) * jnp.uint32(0x9E3779B9) + jnp.uint32(seed & 0xFFFFFFFF)
    h = h ^ (h >> 16)
    h = h * jnp.uint32(0x85EBCA6B)
    h = h ^ (h >> 13)
    h = h * jnp.uint32(0xC2B2AE35)
    h = h ^ (h >> 16)

    # Integer-threshold compare: keep iff bits >= rate * 2^32 (no float convert).
    thresh = min(int(round(rate * 4294967296.0)), 0xFFFFFFFF)
    keep = h >= jnp.uint32(thresh)

    scale = jnp.float32(1.0 / (1.0 - rate))
    o_ref[...] = jnp.where(keep, y * scale, jnp.float32(0.0)).astype(o_ref.dtype)


# ----------------------------------------------------------------------------
# Wrapper
# ----------------------------------------------------------------------------
def positional_encoding_forward(
    x: jnp.ndarray,
    pe_table: jnp.ndarray,
    *,
    dropout_rate: float = 0.1,
    training: bool = False,
    seed: int = 0,
) -> jnp.ndarray:
    """x: (seq_len, batch, d_model); pe_table: (max_len, d_model)."""
    S, B, D = x.shape
    max_len = pe_table.shape[0]
    assert S <= max_len, "sequence longer than positional-encoding table"

    if pe_table.dtype != x.dtype:
        pe_table = pe_table.astype(x.dtype)
    # Metadata-only reshape (no HBM copy); BlockSpec picks the [:S] rows.
    pe3 = pe_table.reshape(max_len, 1, D)

    # --- tile selection over the sequence axis --------------------------------
    # Target ~2 MiB per x block (double-buffered x + out + pe stays well under
    # 32 MiB scoped VMEM -> safe on v5e/v6e/v7x) and >= 512 sublane rows.
    itemsize = jnp.dtype(x.dtype).itemsize
    bytes_per_row = max(1, B * D * itemsize)
    ts = max(1, (2 * 1024 * 1024) // bytes_per_row)
    ts = max(ts, pl.cdiv(512, max(1, B)))        # aim for >= 512 sublane rows
    ts = min(ts, S)
    if ts >= 8:
        ts -= ts % 8                              # keep tile rows 8-aligned
    grid = (pl.cdiv(S, ts),)

    # NOTE: last two block dims equal the full array dims, so the (8,128)
    # constraint is satisfied for any B/D.  For realistic transformer widths
    # (D a multiple of 128) the output is lane-dense; the tiny demo D=32 is not,
    # which only matters at toy sizes.
    x_spec = pl.BlockSpec((ts, B, D), lambda i: (i, 0, 0))
    pe_spec = pl.BlockSpec((ts, 1, D), lambda i: (i, 0, 0))
    out_spec = pl.BlockSpec((ts, B, D), lambda i: (i, 0, 0))

    compiler_params = pltpu.CompilerParams(
        dimension_semantics=("parallel",),        # megacore split on v7x
        vmem_limit_bytes=32 * 1024 * 1024,
    )

    if (not training) or dropout_rate == 0.0:
        kernel = _pe_add_kernel                   # eval mode: dropout = identity
    else:
        kernel = functools.partial(
            _pe_add_dropout_kernel, rate=float(dropout_rate), seed=int(seed)
        )

    # (If the caller donates x, input_output_aliases={0: 0} would additionally
    #  reuse x's HBM buffer for the output; omitted here to keep x readable.)
    return pl.pallas_call(
        kernel,
        out_shape=jax.ShapeDtypeStruct((S, B, D), x.dtype),
        grid=grid,
        in_specs=[x_spec, pe_spec],
        out_specs=out_spec,
        compiler_params=compiler_params,
    )(x, pe3)


# ----------------------------------------------------------------------------
# Demo / correctness check
# ----------------------------------------------------------------------------
if __name__ == "__main__":
    seq_len, batch, d_model, max_len = 8, 2, 32, 64

    key = jax.random.PRNGKey(0)
    x = jax.random.normal(key, (seq_len, batch, d_model), dtype=jnp.float32)

    pe_table = build_pe_table(max_len, d_model)

    # eval-mode forward (deterministic; dropout = identity)
    out = positional_encoding_forward(x, pe_table, dropout_rate=0.1, training=False)
    out = jax.block_until_ready(out)

    ref = x + pe_table[:seq_len][:, None, :]
    assert out.shape == (seq_len, batch, d_model)
    assert jnp.allclose(out, ref, atol=1e-6, rtol=1e-6)

    # training-mode forward (stochastic inverted dropout applied in-kernel)
    # TODO(synk): dropout mask is generated by an in-kernel counter hash, so it
    # will not bit-match torch's RNG stream (semantics match: drop p, scale 1/(1-p)).
    p = 0.1
    out_train = positional_encoding_forward(
        x, pe_table, dropout_rate=p, training=True, seed=1234
    )
    out_train = jax.block_until_ready(out_train)

    # Every element is either exactly dropped (0) or equal to (x+pe)/(1-p).
    scaled = ref * jnp.float32(1.0 / (1.0 - p))
    ok = jnp.isclose(out_train, scaled, atol=1e-5, rtol=1e-5) | (out_train == 0.0)
    assert bool(jnp.all(ok))

    print("KERNEL_OK")
</pallas_src>

<mosaic_0001>
module attributes {stable_mosaic.version = 11 : i64} {
  func.func @_pe_add_kernel(%arg0: i32, %arg1: memref<8x2x32xf32, #tpu.memory_space<vmem>>, %arg2: memref<8x1x32xf32, #tpu.memory_space<vmem>>, %arg3: memref<8x2x32xf32, #tpu.memory_space<vmem>>) attributes {dimension_semantics = [#tpu.dimension_semantics<parallel>], iteration_bounds = array<i64: 1>, scalar_prefetch = 0 : i64, scratch_operands = 0 : i64, tpu.core_type = #tpu.core_type<tc>, window_params = [{transform_indices = @transform_0, window_bounds = array<i64: 8, 2, 32>}, {transform_indices = @transform_1, window_bounds = array<i64: 8, 1, 32>}, {transform_indices = @transform_2, window_bounds = array<i64: 8, 2, 32>}]} {
    %c0 = arith.constant 0 : index
    %c0_0 = arith.constant 0 : index
    %c0_1 = arith.constant 0 : index
    %0 = vector.load %arg1[%c0, %c0_0, %c0_1] : memref<8x2x32xf32, #tpu.memory_space<vmem>>, vector<8x2x32xf32>
    %c0_2 = arith.constant 0 : index
    %c0_3 = arith.constant 0 : index
    %c0_4 = arith.constant 0 : index
    %1 = vector.load %arg2[%c0_2, %c0_3, %c0_4] : memref<8x1x32xf32, #tpu.memory_space<vmem>>, vector<8x1x32xf32>
    %2 = vector.broadcast %1 : vector<8x1x32xf32> to vector<8x2x32xf32>
    %3 = arith.addf %0, %2 : vector<8x2x32xf32>
    %c0_5 = arith.constant 0 : index
    %c0_6 = arith.constant 0 : index
    %c0_7 = arith.constant 0 : index
    %4 = vector.load %arg3[%c0_5, %c0_6, %c0_7] : memref<8x2x32xf32, #tpu.memory_space<vmem>>, vector<8x2x32xf32>
    tpu.vector_store %arg3[%c0_5, %c0_6, %c0_7], %3 {strides = array<i32>} : memref<8x2x32xf32, #tpu.memory_space<vmem>>, vector<8x2x32xf32>,
    return
  }
  func.func @transform_0(%arg0: i32) -> (i32, i32, i32) {
    %c0_i32 = arith.constant 0 : i32
    %c0_i32_0 = arith.constant 0 : i32
    %c0_i32_1 = arith.constant 0 : i32
    return %arg0, %c0_i32, %c0_i32_0 : i32, i32, i32
  }
  func.func @transform_1(%arg0: i32) -> (i32, i32, i32) {
    %c0_i32 = arith.constant 0 : i32
    %c0_i32_0 = arith.constant 0 : i32
    %c0_i32_1 = arith.constant 0 : i32
    return %arg0, %c0_i32, %c0_i32_0 : i32, i32, i32
  }
  func.func @transform_2(%arg0: i32) -> (i32, i32, i32) {
    %c0_i32 = arith.constant 0 : i32
    %c0_i32_0 = arith.constant 0 : i32
    %c0_i32_1 = arith.constant 0 : i32
    return %arg0, %c0_i32, %c0_i32_0 : i32, i32, i32
  }
}

</mosaic_0001>

<llo_original>
// kernel: tpu_custom_call.1
$region0: #{tpu_custom_call.1}
  #allocation0 [shape = 'u32[]', space=smem, size = 0x4, offset = 0x4, fixed_abs, tag = 'smem constant byte address 0x4 - core index']
  #allocation1 [shape = 'u32[72,128]{1,0:T(1,128)}', space=vmem, size = 0x9000, scoped, tag = 'internal scratch']
  %s0 = inlined_call_operand.vmem [shape: f32[8,2,32], index: 0, kind: input, shape index: {}]
  %s1 = inlined_call_operand.vmem [shape: f32[64,1,32], index: 1, kind: input, shape index: {}]
  %s2 = inlined_call_operand.hbm [shape: f32[8,2,32], index: 2, kind: output, shape index: {}]
  %s3 = sld [smem:[#allocation0]]
  $region18: #{tpu_custom_call.1} parent=0
    _
  %s5 = ssub.s32 1, %s3
  %s6 = scalar_select 0, %s5, %s3
  $region1: #{tpu_custom_call.1} parent=0
    #allocation2 [shape = 'u8[8192]{0}', space=vmem, size = 0x2000, scoped, tag = 'output window, operand 0, single buffered']
    #allocation3 [shape = 's32[1]{0}', space=sflag, size = 0x4, scoped, tag = 'scoped memory for tpu_custom_call.1']
    %7 = vsyncpa [#allocation3], 0
    // Predicated region
    $region2: #{tpu_custom_call.1} parent=1 // pred_check
      _
    $region3: #{tpu_custom_call.1} parent=1 // pred_check_branch
      %9 = sbr.rel (0) target = $region5
    $region4: #{tpu_custom_call.1} parent=1 // pred_region
      _
    $region5: #{tpu_custom_call.1} parent=1 // pred_fallthru
      _
    // Predicated region
    $region6: #{tpu_custom_call.1} parent=1 // pred_check
      _
    $region7: #{tpu_custom_call.1} parent=1 // pred_check_branch
      %11 = sbr.rel (0) target = $region9
    $region8: #{tpu_custom_call.1} parent=1 // pred_region
      _
    $region9: #{tpu_custom_call.1} parent=1 // pred_fallthru
      _
    %v12 = vld [vmem:[%s0] sm:$0x3]
    %v13 = vld [vmem:[%s0 + $0x2] sm:$0x3]
    %v14 = vld [vmem:[%s0 + $0x4] sm:$0x3]
    %v15 = vld [vmem:[%s0 + $0x6] sm:$0x3]
    %v16 = vld [vmem:[%s0 + $0x8] sm:$0x3]
    %v17 = vld [vmem:[%s0 + $0xa] sm:$0x3]
    %v18 = vld [vmem:[%s0 + $0xc] sm:$0x3]
    %v19 = vld [vmem:[%s0 + $0xe] sm:$0x3]
    %v20 = vld [vmem:[%s1] sm:$0x1]
    %v21 = vld [vmem:[%s1 + $0x1] sm:$0x1]
    %v22 = vld [vmem:[%s1 + $0x2] sm:$0x1]
    %v23 = vld [vmem:[%s1 + $0x3] sm:$0x1]
    %v24 = vld [vmem:[%s1 + $0x4] sm:$0x1]
    %v25 = vld [vmem:[%s1 + $0x5] sm:$0x1]
    %v26 = vld [vmem:[%s1 + $0x6] sm:$0x1]
    %v27 = vld [vmem:[%s1 + $0x7] sm:$0x1]
    %v36 = vperm.slane %v20, 0
    %v37 = vperm.slane %v21, 0
    %v38 = vperm.slane %v22, 0
    %v39 = vperm.slane %v23, 0
    %v40 = vperm.slane %v24, 0
    %v41 = vperm.slane %v25, 0
    %v42 = vperm.slane %v26, 0
    %v43 = vperm.slane %v27, 0
    %v52 = vadd.f32 %v12, %v36
    %v53 = vadd.f32 %v13, %v37
    %v54 = vadd.f32 %v14, %v38
    %v55 = vadd.f32 %v15, %v39
    %v56 = vadd.f32 %v16, %v40
    %v57 = vadd.f32 %v17, %v41
    %v58 = vadd.f32 %v18, %v42
    %v59 = vadd.f32 %v19, %v43
    %vm60 = vcmask 254976
    %61 = vst.msk [vmem:[#allocation2] sm:$0x3] %vm60, %v52
    %62 = vst.msk [vmem:[#allocation2 + $0x2] sm:$0x3] %vm60, %v53
    %63 = vst.msk [vmem:[#allocation2 + $0x4] sm:$0x3] %vm60, %v54
    %64 = vst.msk [vmem:[#allocation2 + $0x6] sm:$0x3] %vm60, %v55
    %65 = vst.msk [vmem:[#allocation2 + $0x8] sm:$0x3] %vm60, %v56
    %66 = vst.msk [vmem:[#allocation2 + $0xa] sm:$0x3] %vm60, %v57
    %67 = vst.msk [vmem:[#allocation2 + $0xc] sm:$0x3] %vm60, %v58
    %68 = vst.msk [vmem:[#allocation2 + $0xe] sm:$0x3] %vm60, %v59
    // Predicated region
    $region10: #{tpu_custom_call.1} parent=1 // pred_check
      _
    $region11: #{tpu_custom_call.1} parent=1 // pred_check_branch
      %70 = sbr.rel (0) target = $region13
    $region12: #{tpu_custom_call.1} parent=1 // pred_region
      %72 = vsyncadd [#allocation3], 0
      %s73 = sshll.u32 [#allocation2], 4
      %s74 = int_to_ptr.vmem [resolvable:$true] %s73
      %s75 = sshll.u32 %s2, 4
      %s76 = int_to_ptr.hbm [resolvable:$true] %s75
      %81 = dma.vmem_to_hbm [thread:$0]  %s74, 256, %s76, [#allocation3], 32, 32, 2
    $region13: #{tpu_custom_call.1} parent=1 // pred_fallthru
      _
    // Predicated region
    $region14: #{tpu_custom_call.1} parent=1 // pred_check
      _
    $region15: #{tpu_custom_call.1} parent=1 // pred_check_branch
      %83 = sbr.rel (0) target = $region17
    $region16: #{tpu_custom_call.1} parent=1 // pred_region
      %85 = dma.done [#allocation3], 256
    $region17: #{tpu_custom_call.1} parent=1 // pred_fallthru
      _
    %86 = vsyncpa [#allocation3], 1

</llo_original>
